<compile_context>
chip_gen: v6e
topology: v6e:2x2x1
jax: 0.10.0
libtpu: 0.0.40
codegen_flags: <defaults>
</compile_context>

<pallas_src>
import functools

import jax
import jax.numpy as jnp
from jax.experimental import pallas as pl
from jax.experimental.pallas import tpu as pltpu

LANE = 128
SUBLANE = 8


def _round_up(a, b):
    return ((a + b - 1) // b) * b


def _cim_kernel(xa_ref, wa_ref, o_ref, *, neg_inv_two_sigma_sq):
    """One (TB, TM) tile of CIM distances.

    xa_ref: (TB, D_aug)   augmented inputs  [-2*x | 1 | ||x||^2 | 0-pad]
    wa_ref: (D_aug, TM)   augmented weights [ w^T ; ||w||^2 ; 1 ; 0-pad]
    o_ref : (TB, TM)      CIM distances for this tile
    """
    # Single MXU dot yields ||x||^2 + ||w||^2 - 2 x.w directly.
    sq_dist = jnp.dot(
        xa_ref[...], wa_ref[...],
        preferred_element_type=jnp.float32,
        precision=jax.lax.Precision.HIGHEST,
    )
    # Cancellation in the Gram identity can go slightly negative, which would
    # make sim > 1 and the sqrt NaN.
    sq_dist = jnp.maximum(sq_dist, 0.0)
    sim = jnp.exp(sq_dist * neg_inv_two_sigma_sq)   # EUP transcendental
    o_ref[...] = jnp.sqrt(1.0 - sim + 1e-08)        # EUP


def prepare_som_weights(weights, *, tm_cap=4096, vmem_budget_bytes=24 << 20,
                        tb_max=256):
    """Pad / transpose / augment SOM weights once; reuse across forward calls.

    weights: (rows, cols, D) float array.
    Returns a dict holding the augmented (D_aug, M_pad) weight slab plus the
    tiling parameters derived from a per-generation-safe VMEM budget.
    """
    rows, cols, D = weights.shape
    M = rows * cols
    D_aug = _round_up(D + 2, SUBLANE)

    # VMEM budget -> TM: double-buffered weight + output columns per TM lane,
    # plus the double-buffered resident x tile.
    per_lane = 2 * 4 * (D_aug + tb_max)
    fixed = 2 * 4 * tb_max * D_aug
    tm_budget = max(vmem_budget_bytes - fixed, LANE * per_lane) // per_lane
    tm_budget = max(LANE, min(tm_cap, (tm_budget // LANE) * LANE))

    M_lane = _round_up(M, LANE)          # minimal (lane-aligned) unit padding
    q = M_lane // LANE
    d_budget = tm_budget // LANE
    if q <= d_budget:
        if q >= 2:
            # Split into exactly 2 unit-axis steps so a 2-TC chip (v7x) can
            # shard the parallel grid; costs at most 128 dead columns.
            TM = LANE * ((q + 1) // 2)
            M_pad = 2 * TM
        else:
            TM = LANE
            M_pad = LANE
    else:
        TM = LANE * d_budget
        M_pad = _round_up(M_lane, TM)    # >= 2 steps automatically

    w_flat = weights.reshape(M, D).astype(jnp.float32)
    w_aug = jnp.zeros((D_aug, M_pad), jnp.float32)
    w_aug = w_aug.at[:D, :M].set(w_flat.T)
    w_aug = w_aug.at[D, :M].set(jnp.sum(w_flat * w_flat, axis=-1))  # ||w||^2
    w_aug = w_aug.at[D + 1, :M].set(1.0)

    return dict(w_aug=w_aug, rows=rows, cols=cols, M=M, D=D, D_aug=D_aug,
                TM=TM, M_pad=M_pad, tb_max=tb_max)


def toroidal_som_cim(x, weights=None, cim_kernel_sigma=1.0, *, prepared=None):
    """Pallas equivalent of ToroidalSOM_2.forward.

    x:       (B, D) float
    weights: (rows, cols, D) float (ignored if `prepared` is given)
    returns: (B, rows, cols) float32 CIM distances
    """
    if prepared is None:
        prepared = prepare_som_weights(weights)

    B, D = x.shape
    if D != prepared["D"]:
        raise ValueError("input dim does not match prepared SOM weights")
    rows, cols = prepared["rows"], prepared["cols"]
    M, M_pad = prepared["M"], prepared["M_pad"]
    D_aug, TM = prepared["D_aug"], prepared["TM"]

    # Batch tiling: sublane-aligned, up to tb_max rows per step.
    B8 = _round_up(max(B, SUBLANE), SUBLANE)
    TB = min(B8, prepared["tb_max"])
    B_pad = _round_up(B8, TB)

    xf = x.astype(jnp.float32)
    x_aug = jnp.zeros((B_pad, D_aug), jnp.float32)
    x_aug = x_aug.at[:B, :D].set(-2.0 * xf)
    x_aug = x_aug.at[:B, D].set(1.0)                             # * ||w||^2 row
    x_aug = x_aug.at[:B, D + 1].set(jnp.sum(xf * xf, axis=-1))   # * ones row

    neg_inv_two_sigma_sq = float(-1.0 / (2.0 * float(cim_kernel_sigma) ** 2))
    kernel = functools.partial(
        _cim_kernel, neg_inv_two_sigma_sq=neg_inv_two_sigma_sq
    )

    # Explicit VMEM limit: double-buffered x / weight / output tiles + margin;
    # stays under v7x's 64 MiB physical cap, above v5e's 16 MiB scoped default.
    vmem_bytes = 4 * (2 * TB * D_aug + 2 * D_aug * TM + 2 * TB * TM)
    vmem_limit = int(min(max(2 * vmem_bytes, 16 << 20), 48 << 20))

    out = pl.pallas_call(
        kernel,
        out_shape=jax.ShapeDtypeStruct((B_pad, M_pad), jnp.float32),
        grid_spec=pltpu.PrefetchScalarGridSpec(
            num_scalar_prefetch=0,
            grid=(B_pad // TB, M_pad // TM),
            in_specs=[
                # augmented inputs: march along the batch axis only.
                pl.BlockSpec((TB, D_aug), lambda b, m: (b, 0)),
                # augmented transposed weights: march along the unit axis only.
                pl.BlockSpec((D_aug, TM), lambda b, m: (0, m)),
            ],
            out_specs=pl.BlockSpec((TB, TM), lambda b, m: (b, m)),
        ),
        compiler_params=pltpu.CompilerParams(
            dimension_semantics=("parallel", "parallel"),
            vmem_limit_bytes=vmem_limit,
        ),
    )(x_aug, prepared["w_aug"])

    # Skip the slice copy entirely when no padding was introduced.
    if B_pad == B and M_pad == M:
        return out.reshape(B, rows, cols)
    return out[:B, :M].reshape(B, rows, cols)


def _reference_cim(x, weights, cim_kernel_sigma):
    """Plain-JAX reference mirroring the PyTorch forward exactly."""
    diff = weights[None, :, :, :] - x[:, None, None, :]
    sq_dist = jnp.sum(diff ** 2, axis=3)
    sim = jnp.exp(-sq_dist / (2.0 * cim_kernel_sigma ** 2))
    return jnp.sqrt(1.0 - sim + 1e-08)


if __name__ == "__main__":
    key = jax.random.PRNGKey(0)
    cim_kernel_sigma = 0.7

    # Case 1: module-sized small grid (8x16 -> 128 units), batch 8, dim 32.
    # No batch / unit padding -> exercises the slice-free output path.
    rows, cols, input_dim, batch = 8, 16, 32, 8
    k1, k2, key = jax.random.split(key, 3)
    x1 = jax.random.normal(k1, (batch, input_dim), dtype=jnp.float32)
    w1 = jax.random.normal(k2, (rows, cols, input_dim), dtype=jnp.float32)
    cim1 = jax.block_until_ready(toroidal_som_cim(x1, w1, cim_kernel_sigma))
    ref1 = jax.block_until_ready(_reference_cim(x1, w1, cim_kernel_sigma))
    assert cim1.shape == (batch, rows, cols) and cim1.dtype == jnp.float32
    assert jnp.allclose(cim1, ref1, atol=1e-4, rtol=1e-4)

    # Case 2: exercises minimal unit padding (24*25 = 600 -> 640 lanes, split
    # into 2 parallel unit steps) and batch padding (5 -> 8).
    rows, cols, input_dim, batch = 24, 25, 32, 5
    k3, k4, key = jax.random.split(key, 3)
    x2 = 0.5 * jax.random.normal(k3, (batch, input_dim), dtype=jnp.float32)
    w2 = 0.5 * jax.random.normal(k4, (rows, cols, input_dim), dtype=jnp.float32)
    cim2 = jax.block_until_ready(toroidal_som_cim(x2, w2, cim_kernel_sigma))
    ref2 = jax.block_until_ready(_reference_cim(x2, w2, cim_kernel_sigma))
    assert cim2.shape == (batch, rows, cols) and cim2.dtype == jnp.float32
    assert jnp.allclose(cim2, ref2, atol=1e-4, rtol=1e-4)

    # Case 3: cached-weight path (prepare once, reuse for a new batch).
    prep = prepare_som_weights(w2)
    k5, key = jax.random.split(key)
    x3 = 0.5 * jax.random.normal(k5, (3, input_dim), dtype=jnp.float32)
    cim3 = jax.block_until_ready(
        toroidal_som_cim(x3, cim_kernel_sigma=cim_kernel_sigma, prepared=prep))
    ref3 = jax.block_until_ready(_reference_cim(x3, w2, cim_kernel_sigma))
    assert cim3.shape == (3, rows, cols)
    assert jnp.allclose(cim3, ref3, atol=1e-4, rtol=1e-4)

    print("KERNEL_OK")
</pallas_src>

<mosaic_0001>
module attributes {stable_mosaic.version = 11 : i64} {
  func.func @_cim_kernel(%arg0: i32, %arg1: i32, %arg2: memref<8x40xf32, #tpu.memory_space<vmem>>, %arg3: memref<40x128xf32, #tpu.memory_space<vmem>>, %arg4: memref<8x128xf32, #tpu.memory_space<vmem>>) attributes {dimension_semantics = [#tpu.dimension_semantics<parallel>, #tpu.dimension_semantics<parallel>], iteration_bounds = array<i64: 1, 1>, scalar_prefetch = 0 : i64, scratch_operands = 0 : i64, tpu.core_type = #tpu.core_type<tc>, window_params = [{transform_indices = @transform_0, window_bounds = array<i64: 8, 40>}, {transform_indices = @transform_1, window_bounds = array<i64: 40, 128>}, {transform_indices = @transform_2, window_bounds = array<i64: 8, 128>}]} {
    %c0 = arith.constant 0 : index
    %c0_0 = arith.constant 0 : index
    %0 = vector.load %arg2[%c0, %c0_0] : memref<8x40xf32, #tpu.memory_space<vmem>>, vector<8x40xf32>
    %c0_1 = arith.constant 0 : index
    %c0_2 = arith.constant 0 : index
    %1 = vector.load %arg3[%c0_1, %c0_2] : memref<40x128xf32, #tpu.memory_space<vmem>>, vector<40x128xf32>
    %cst = arith.constant dense<0.000000e+00> : vector<8x128xf32>
    %2 = tpu.matmul %0, %1, %cst {dimension_numbers = #tpu.dot_dimension_numbers<[1], [0], [0], [1], [0, 0, 1, 1], [], []>, precision = #tpu.contract_precision<fp32>} : vector<8x40xf32>, vector<40x128xf32>, vector<8x128xf32> -> vector<8x128xf32>
    %cst_3 = arith.constant 0.000000e+00 : f32
    %3 = vector.broadcast %cst_3 : f32 to vector<8x128xf32>
    %4 = arith.maximumf %2, %3 : vector<8x128xf32>
    %cst_4 = arith.constant -1.02040815 : f32
    %5 = vector.broadcast %cst_4 : f32 to vector<8x128xf32>
    %6 = arith.mulf %4, %5 : vector<8x128xf32>
    %7 = math.exp %6 : vector<8x128xf32>
    %cst_5 = arith.constant 1.000000e+00 : f32
    %8 = vector.broadcast %cst_5 : f32 to vector<8x128xf32>
    %9 = arith.subf %8, %7 : vector<8x128xf32>
    %cst_6 = arith.constant 9.99999993E-9 : f32
    %10 = vector.broadcast %cst_6 : f32 to vector<8x128xf32>
    %11 = arith.addf %9, %10 : vector<8x128xf32>
    %12 = math.sqrt %11 : vector<8x128xf32>
    %c0_7 = arith.constant 0 : index
    %c0_8 = arith.constant 0 : index
    %13 = vector.load %arg4[%c0_7, %c0_8] : memref<8x128xf32, #tpu.memory_space<vmem>>, vector<8x128xf32>
    tpu.vector_store %arg4[%c0_7, %c0_8], %12 {strides = array<i32>} : memref<8x128xf32, #tpu.memory_space<vmem>>, vector<8x128xf32>,
    return
  }
  func.func @transform_0(%arg0: i32, %arg1: i32) -> (i32, i32) {
    %c0_i32 = arith.constant 0 : i32
    %c0_i32_0 = arith.constant 0 : i32
    return %arg0, %c0_i32 : i32, i32
  }
  func.func @transform_1(%arg0: i32, %arg1: i32) -> (i32, i32) {
    %c0_i32 = arith.constant 0 : i32
    %c0_i32_0 = arith.constant 0 : i32
    return %c0_i32, %arg1 : i32, i32
  }
  func.func @transform_2(%arg0: i32, %arg1: i32) -> (i32, i32) {
    %c0_i32 = arith.constant 0 : i32
    return %arg0, %arg1 : i32, i32
  }
}

</mosaic_0001>

<llo_original>
// kernel: tpu_custom_call.1
$region0: #{tpu_custom_call.1}
  #allocation0 [shape = 'u32[]', space=smem, size = 0x4, offset = 0x4, fixed_abs, tag = 'smem constant byte address 0x4 - core index']
  #allocation1 [shape = 'u32[144,128]{1,0:T(1,128)}', space=vmem, size = 0x12000, scoped, tag = 'internal scratch']
  %s0 = inlined_call_operand.hbm [shape: f32[8,40], index: 0, kind: input, shape index: {}]
  %s1 = inlined_call_operand.hbm [shape: f32[40,128], index: 1, kind: input, shape index: {}]
  %s2 = inlined_call_operand.hbm [shape: f32[8,128], index: 2, kind: output, shape index: {}]
  %s3 = sld [smem:[#allocation0]]
  $region26: #{tpu_custom_call.1} parent=0
    _
  %s5 = ssub.s32 1, %s3
  %s6 = scalar_select 0, %s5, %s3
  $region1: #{tpu_custom_call.1} parent=0
    #allocation2 [shape = 'u8[4096]{0}', space=vmem, size = 0x1000, scoped, tag = 'input window, operand 0, single buffered']
    #allocation3 [shape = 's32[1]{0}', space=sflag, size = 0x4, scoped, tag = 'scoped memory for tpu_custom_call.1']
    #allocation4 [shape = 's32[1]{0}', space=sflag, size = 0x4, scoped, tag = 'scoped memory for tpu_custom_call.1']
    #allocation5 [shape = 'u8[20480]{0}', space=vmem, size = 0x5000, scoped, tag = 'input window, operand 1, single buffered']
    #allocation6 [shape = 's32[1]{0}', space=sflag, size = 0x4, scoped, tag = 'scoped memory for tpu_custom_call.1']
    #allocation7 [shape = 'u8[4096]{0}', space=vmem, size = 0x1000, scoped, tag = 'output window, operand 0, single buffered']
    %7 = vsyncpa [#allocation3], 0
    %8 = vsyncpa [#allocation6], 0
    %9 = vsyncpa [#allocation4], 0
    // Predicated region
    $region2: #{tpu_custom_call.1} parent=1 // pred_check
      _
    $region3: #{tpu_custom_call.1} parent=1 // pred_check_branch
      %11 = sbr.rel (0) target = $region5
    $region4: #{tpu_custom_call.1} parent=1 // pred_region
      %s13 = ssub.s32 128, 128
      %14 = vsyncadd [#allocation3], %s13
      %s16 = sshll.u32 [#allocation2], 4
      %s17 = int_to_ptr.vmem [resolvable:$true] %s16
      %19 = dma.hbm_to_vmem [thread:$0]  %s0, 128, %s17, [#allocation3]
    $region5: #{tpu_custom_call.1} parent=1 // pred_fallthru
      _
    // Predicated region
    $region6: #{tpu_custom_call.1} parent=1 // pred_check
      _
    $region7: #{tpu_custom_call.1} parent=1 // pred_check_branch
      %21 = sbr.rel (0) target = $region9
    $region8: #{tpu_custom_call.1} parent=1 // pred_region
      %s23 = ssub.s32 640, 640
      %24 = vsyncadd [#allocation6], %s23
      %s25 = sshll.u32 [#allocation5], 4
      %s26 = int_to_ptr.vmem [resolvable:$true] %s25
      %31 = dma.hbm_to_vmem [thread:$0]  %s1, 640, %s26, [#allocation6], 128, 128, 8
    $region9: #{tpu_custom_call.1} parent=1 // pred_fallthru
      _
    // Predicated region
    $region10: #{tpu_custom_call.1} parent=1 // pred_check
      _
    $region11: #{tpu_custom_call.1} parent=1 // pred_check_branch
      %33 = sbr.rel (0) target = $region13
    $region12: #{tpu_custom_call.1} parent=1 // pred_region
      %34 = dma.done [#allocation3], 128
    $region13: #{tpu_custom_call.1} parent=1 // pred_fallthru
      _
    // Predicated region
    $region14: #{tpu_custom_call.1} parent=1 // pred_check
      _
    $region15: #{tpu_custom_call.1} parent=1 // pred_check_branch
      %36 = sbr.rel (0) target = $region17
    $region16: #{tpu_custom_call.1} parent=1 // pred_region
      %37 = dma.done [#allocation6], 640
    $region17: #{tpu_custom_call.1} parent=1 // pred_fallthru
      _
    %v38 = vld [vmem:[#allocation2] sm:$0xff]
    %v39 = vld [vmem:[#allocation5] sm:$0xff]
    %v40 = vld [vmem:[#allocation5 + $0x8] sm:$0xff]
    %v41 = vld [vmem:[#allocation5 + $0x10] sm:$0xff]
    %v42 = vld [vmem:[#allocation5 + $0x18] sm:$0xff]
    %v43 = vld [vmem:[#allocation5 + $0x20] sm:$0xff]
    %vm44 = vcmask 326656
    %v46 = vsel %vm44, %v38, 0
    %48 = vmatprep.subr.mxu0 0.0
    %49 = vmatpush1.msra.mxu0 0.0
    %50 = vmatprep.subr.mxu0 0.0
    %51 = vmatpush1.msra.mxu0 0.0
    %52 = vmatprep.subr.mxu0 0.0
    %53 = vmatpush1.msra.mxu0 0.0
    %54 = vmatprep.subr.mxu0 0.0
    %55 = vmatpush1.msra.mxu0 0.0
    %56 = vmatprep.subr.mxu0 0.0
    %57 = vmatpush1.msra.mxu0 0.0
    %58 = vmatprep.subr.mxu0 0.0
    %59 = vmatpush1.msra.mxu0 0.0
    %60 = vmatprep.subr.mxu0 0.0
    %61 = vmatpush1.msra.mxu0 0.0
    %62 = vmatprep.subr.mxu0 0.0
    %63 = vmatpush1.msra.mxu0 0.0
    %64 = vmatprep.subr.mxu0 0.0
    %65 = vmatpush1.msra.mxu0 0.0
    %66 = vmatprep.subr.mxu0 0.0
    %67 = vmatpush1.msra.mxu0 0.0
    %68 = vmatprep.subr.mxu0 0.0
    %69 = vmatpush1.msra.mxu0 0.0
    %70 = vmatprep.subr.mxu0 0.0
    %v71 = vand.u32 %v43, 4294901760
    %72 = vmatpush1.msra.mxu0 %v71
    %73 = vmatprep.subr.mxu0 0.0
    %v74 = vand.u32 %v42, 4294901760
    %75 = vmatpush1.msra.mxu0 %v74
    %76 = vmatprep.subr.mxu0 0.0
    %v77 = vand.u32 %v41, 4294901760
    %78 = vmatpush1.msra.mxu0 %v77
    %79 = vmatprep.subr.mxu0 0.0
    %v80 = vand.u32 %v40, 4294901760
    %81 = vmatpush1.msra.mxu0 %v80
    %82 = vmatprep.subr.mxu0 0.0
    %v83 = vand.u32 %v39, 4294901760
    %84 = vmatpush1.msra.mxu0 %v83
    %85 = vmatprep.subr.mxu0 0.0
    %86 = vmatpush2.msra.mxu0 0.0
    %87 = vmatprep.subr.mxu0 0.0
    %88 = vmatpush2.msra.mxu0 0.0
    %89 = vmatprep.subr.mxu0 0.0
    %90 = vmatpush2.msra.mxu0 0.0
    %91 = vmatprep.subr.mxu0 0.0
    %92 = vmatpush2.msra.mxu0 0.0
    %93 = vmatprep.subr.mxu0 0.0
    %94 = vmatpush2.msra.mxu0 0.0
    %95 = vmatprep.subr.mxu0 0.0
    %96 = vmatpush2.msra.mxu0 0.0
    %97 = vmatprep.subr.mxu0 0.0
    %98 = vmatpush2.msra.mxu0 0.0
    %99 = vmatprep.subr.mxu0 0.0
    %100 = vmatpush2.msra.mxu0 0.0
    %101 = vmatprep.subr.mxu0 0.0
    %102 = vmatpush2.msra.mxu0 0.0
    %103 = vmatprep.subr.mxu0 0.0
    %104 = vmatpush2.msra.mxu0 0.0
    %105 = vmatprep.subr.mxu0 0.0
    %106 = vmatpush2.msra.mxu0 0.0
    %107 = vmatprep.subr.mxu0 0.0
    %108 = vmatpush2.msra.mxu0 0.0
    %109 = vmatprep.subr.mxu0 0.0
    %110 = vmatpush2.msra.mxu0 0.0
    %111 = vmatprep.subr.mxu0 0.0
    %112 = vmatpush2.msra.mxu0 0.0
    %113 = vmatprep.subr.mxu0 0.0
    %114 = vmatpush2.msra.mxu0 0.0
    %115 = vmatprep.subr.mxu0 0.0
    %116 = vmatpush2.msra.mxu0 0.0
    %117 = vmatprep.mubr.f32.mxu0 0.0
    %v118 = vand.u32 %v46, 4294901760
    %v119 = vsub.f32 %v46, %v118
    %v120 = vand.u32 %v119, 4294901760
    %v121 = vsub.f32 %v119, %v120
    %v122 = vand.u32 %v121, 4294901760
    %123 = vmatmul.mubr.f32.gmra.mxu0 %v122
    %v124 = vpop.f32.mrf.mxu0
    %v125 = vadd.f32 0.0, %v124
    %v126 = vpop.f32.mrf.mxu0
    %127 = vdwg.mxu0
    %128 = vmatprep.subr.mxu0 0.0
    %129 = vmatpush1.msra.mxu0 0.0
    %130 = vmatprep.subr.mxu0 0.0
    %131 = vmatpush1.msra.mxu0 0.0
    %132 = vmatprep.subr.mxu0 0.0
    %133 = vmatpush1.msra.mxu0 0.0
    %134 = vmatprep.subr.mxu0 0.0
    %135 = vmatpush1.msra.mxu0 0.0
    %136 = vmatprep.subr.mxu0 0.0
    %137 = vmatpush1.msra.mxu0 0.0
    %138 = vmatprep.subr.mxu0 0.0
    %139 = vmatpush1.msra.mxu0 0.0
    %140 = vmatprep.subr.mxu0 0.0
    %141 = vmatpush1.msra.mxu0 0.0
    %142 = vmatprep.subr.mxu0 0.0
    %143 = vmatpush1.msra.mxu0 0.0
    %144 = vmatprep.subr.mxu0 0.0
    %145 = vmatpush1.msra.mxu0 0.0
    %146 = vmatprep.subr.mxu0 0.0
    %147 = vmatpush1.msra.mxu0 0.0
    %148 = vmatprep.subr.mxu0 0.0
    %149 = vmatpush1.msra.mxu0 0.0
    %150 = vmatprep.subr.mxu0 0.0
    %v151 = vand.u32 %v43, 4294901760
    %v152 = vsub.f32 %v43, %v151
    %v153 = vand.u32 %v152, 4294901760
    %v154 = vsub.f32 %v152, %v153
    %v155 = vand.u32 %v154, 4294901760
    %156 = vmatpush1.msra.mxu0 %v155
    %157 = vmatprep.subr.mxu0 0.0
    %v158 = vand.u32 %v42, 4294901760
    %v159 = vsub.f32 %v42, %v158
    %v160 = vand.u32 %v159, 4294901760
    %v161 = vsub.f32 %v159, %v160
    %v162 = vand.u32 %v161, 4294901760
    %163 = vmatpush1.msra.mxu0 %v162
    %164 = vmatprep.subr.mxu0 0.0
    %v165 = vand.u32 %v41, 4294901760
    %v166 = vsub.f32 %v41, %v165
    %v167 = vand.u32 %v166, 4294901760
    %v168 = vsub.f32 %v166, %v167
    %v169 = vand.u32 %v168, 4294901760
    %170 = vmatpush1.msra.mxu0 %v169
    %171 = vmatprep.subr.mxu0 0.0
    %v172 = vand.u32 %v40, 4294901760
    %v173 = vsub.f32 %v40, %v172
    %v174 = vand.u32 %v173, 4294901760
    %v175 = vsub.f32 %v173, %v174
    %v176 = vand.u32 %v175, 4294901760
    %177 = vmatpush1.msra.mxu0 %v176
    %178 = vmatprep.subr.mxu0 0.0
    %v179 = vand.u32 %v39, 4294901760
    %v180 = vsub.f32 %v39, %v179
    %v181 = vand.u32 %v180, 4294901760
    %v182 = vsub.f32 %v180, %v181
    %v183 = vand.u32 %v182, 4294901760
    %184 = vmatpush1.msra.mxu0 %v183
    %185 = vmatprep.subr.mxu0 0.0
    %186 = vmatpush2.msra.mxu0 0.0
    %187 = vmatprep.subr.mxu0 0.0
    %188 = vmatpush2.msra.mxu0 0.0
    %189 = vmatprep.subr.mxu0 0.0
    %190 = vmatpush2.msra.mxu0 0.0
    %191 = vmatprep.subr.mxu0 0.0
    %192 = vmatpush2.msra.mxu0 0.0
    %193 = vmatprep.subr.mxu0 0.0
    %194 = vmatpush2.msra.mxu0 0.0
    %195 = vmatprep.subr.mxu0 0.0
    %196 = vmatpush2.msra.mxu0 0.0
    %197 = vmatprep.subr.mxu0 0.0
    %198 = vmatpush2.msra.mxu0 0.0
    %199 = vmatprep.subr.mxu0 0.0
    %200 = vmatpush2.msra.mxu0 0.0
    %201 = vmatprep.subr.mxu0 0.0
    %202 = vmatpush2.msra.mxu0 0.0
    %203 = vmatprep.subr.mxu0 0.0
    %204 = vmatpush2.msra.mxu0 0.0
    %205 = vmatprep.subr.mxu0 0.0
    %206 = vmatpush2.msra.mxu0 0.0
    %207 = vmatprep.subr.mxu0 0.0
    %208 = vmatpush2.msra.mxu0 0.0
    %209 = vmatprep.subr.mxu0 0.0
    %210 = vmatpush2.msra.mxu0 0.0
    %211 = vmatprep.subr.mxu0 0.0
    %212 = vmatpush2.msra.mxu0 0.0
    %213 = vmatprep.subr.mxu0 0.0
    %214 = vmatpush2.msra.mxu0 0.0
    %215 = vmatprep.subr.mxu0 0.0
    %216 = vmatpush2.msra.mxu0 0.0
    %217 = vmatprep.mubr.f32.mxu0 0.0
    %v218 = vand.u32 %v46, 4294901760
    %219 = vmatmul.mubr.f32.gmra.mxu0 %v218
    %v220 = vpop.f32.mrf.mxu0
    %v221 = vadd.f32 %v125, %v220
    %v222 = vpop.f32.mrf.mxu0
    %223 = vdwg.mxu0
    %224 = vmatprep.subr.mxu0 0.0
    %225 = vmatpush1.msra.mxu0 0.0
    %226 = vmatprep.subr.mxu0 0.0
    %227 = vmatpush1.msra.mxu0 0.0
    %228 = vmatprep.subr.mxu0 0.0
    %229 = vmatpush1.msra.mxu0 0.0
    %230 = vmatprep.subr.mxu0 0.0
    %231 = vmatpush1.msra.mxu0 0.0
    %232 = vmatprep.subr.mxu0 0.0
    %233 = vmatpush1.msra.mxu0 0.0
    %234 = vmatprep.subr.mxu0 0.0
    %235 = vmatpush1.msra.mxu0 0.0
    %236 = vmatprep.subr.mxu0 0.0
    %237 = vmatpush1.msra.mxu0 0.0
    %238 = vmatprep.subr.mxu0 0.0
    %239 = vmatpush1.msra.mxu0 0.0
    %240 = vmatprep.subr.mxu0 0.0
    %241 = vmatpush1.msra.mxu0 0.0
    %242 = vmatprep.subr.mxu0 0.0
    %243 = vmatpush1.msra.mxu0 0.0
    %244 = vmatprep.subr.mxu0 0.0
    %245 = vmatpush1.msra.mxu0 0.0
    %246 = vmatprep.subr.mxu0 0.0
    %v247 = vand.u32 %v43, 4294901760
    %v248 = vsub.f32 %v43, %v247
    %249 = vmatpush1.msra.mxu0 %v248
    %250 = vmatprep.subr.mxu0 0.0
    %v251 = vand.u32 %v42, 4294901760
    %v252 = vsub.f32 %v42, %v251
    %253 = vmatpush1.msra.mxu0 %v252
    %254 = vmatprep.subr.mxu0 0.0
    %v255 = vand.u32 %v41, 4294901760
    %v256 = vsub.f32 %v41, %v255
    %257 = vmatpush1.msra.mxu0 %v256
    %258 = vmatprep.subr.mxu0 0.0
    %v259 = vand.u32 %v40, 4294901760
    %v260 = vsub.f32 %v40, %v259
    %261 = vmatpush1.msra.mxu0 %v260
    %262 = vmatprep.subr.mxu0 0.0
    %v263 = vand.u32 %v39, 4294901760
    %v264 = vsub.f32 %v39, %v263
    %265 = vmatpush1.msra.mxu0 %v264
    %266 = vmatprep.subr.mxu0 0.0
    %267 = vmatpush2.msra.mxu0 0.0
    %268 = vmatprep.subr.mxu0 0.0
    %269 = vmatpush2.msra.mxu0 0.0
    %270 = vmatprep.subr.mxu0 0.0
    %271 = vmatpush2.msra.mxu0 0.0
    %272 = vmatprep.subr.mxu0 0.0
    %273 = vmatpush2.msra.mxu0 0.0
    %274 = vmatprep.subr.mxu0 0.0
    %275 = vmatpush2.msra.mxu0 0.0
    %276 = vmatprep.subr.mxu0 0.0
    %277 = vmatpush2.msra.mxu0 0.0
    %278 = vmatprep.subr.mxu0 0.0
    %279 = vmatpush2.msra.mxu0 0.0
    %280 = vmatprep.subr.mxu0 0.0
    %281 = vmatpush2.msra.mxu0 0.0
    %282 = vmatprep.subr.mxu0 0.0
    %283 = vmatpush2.msra.mxu0 0.0
    %284 = vmatprep.subr.mxu0 0.0
    %285 = vmatpush2.msra.mxu0 0.0
    %286 = vmatprep.subr.mxu0 0.0
    %287 = vmatpush2.msra.mxu0 0.0
    %288 = vmatprep.subr.mxu0 0.0
    %289 = vmatpush2.msra.mxu0 0.0
    %290 = vmatprep.subr.mxu0 0.0
    %291 = vmatpush2.msra.mxu0 0.0
    %292 = vmatprep.subr.mxu0 0.0
    %293 = vmatpush2.msra.mxu0 0.0
    %294 = vmatprep.subr.mxu0 0.0
    %295 = vmatpush2.msra.mxu0 0.0
    %296 = vmatprep.subr.mxu0 0.0
    %297 = vmatpush2.msra.mxu0 0.0
    %298 = vmatprep.mubr.f32.mxu0 0.0
    %v299 = vand.u32 %v46, 4294901760
    %v300 = vsub.f32 %v46, %v299
    %301 = vmatmul.mubr.f32.gmra.mxu0 %v300
    %v302 = vpop.f32.mrf.mxu0
    %v303 = vadd.f32 %v221, %v302
    %v304 = vpop.f32.mrf.mxu0
    %305 = vdwg.mxu0
    %306 = vmatprep.subr.mxu0 0.0
    %307 = vmatpush1.msra.mxu0 0.0
    %308 = vmatprep.subr.mxu0 0.0
    %309 = vmatpush1.msra.mxu0 0.0
    %310 = vmatprep.subr.mxu0 0.0
    %311 = vmatpush1.msra.mxu0 0.0
    %312 = vmatprep.subr.mxu0 0.0
    %313 = vmatpush1.msra.mxu0 0.0
    %314 = vmatprep.subr.mxu0 0.0
    %315 = vmatpush1.msra.mxu0 0.0
    %316 = vmatprep.subr.mxu0 0.0
    %317 = vmatpush1.msra.mxu0 0.0
    %318 = vmatprep.subr.mxu0 0.0
    %319 = vmatpush1.msra.mxu0 0.0
    %320 = vmatprep.subr.mxu0 0.0
    %321 = vmatpush1.msra.mxu0 0.0
    %322 = vmatprep.subr.mxu0 0.0
    %323 = vmatpush1.msra.mxu0 0.0
    %324 = vmatprep.subr.mxu0 0.0
    %325 = vmatpush1.msra.mxu0 0.0
    %326 = vmatprep.subr.mxu0 0.0
    %327 = vmatpush1.msra.mxu0 0.0
    %328 = vmatprep.subr.mxu0 0.0
    %v329 = vand.u32 %v43, 4294901760
    %330 = vmatpush1.msra.mxu0 %v329
    %331 = vmatprep.subr.mxu0 0.0
    %v332 = vand.u32 %v42, 4294901760
    %333 = vmatpush1.msra.mxu0 %v332
    %334 = vmatprep.subr.mxu0 0.0
    %v335 = vand.u32 %v41, 4294901760
    %336 = vmatpush1.msra.mxu0 %v335
    %337 = vmatprep.subr.mxu0 0.0
    %v338 = vand.u32 %v40, 4294901760
    %339 = vmatpush1.msra.mxu0 %v338
    %340 = vmatprep.subr.mxu0 0.0
    %v341 = vand.u32 %v39, 4294901760
    %342 = vmatpush1.msra.mxu0 %v341
    %343 = vmatprep.subr.mxu0 0.0
    %344 = vmatpush2.msra.mxu0 0.0
    %345 = vmatprep.subr.mxu0 0.0
    %346 = vmatpush2.msra.mxu0 0.0
    %347 = vmatprep.subr.mxu0 0.0
    %348 = vmatpush2.msra.mxu0 0.0
    %349 = vmatprep.subr.mxu0 0.0
    %350 = vmatpush2.msra.mxu0 0.0
    %351 = vmatprep.subr.mxu0 0.0
    %352 = vmatpush2.msra.mxu0 0.0
    %353 = vmatprep.subr.mxu0 0.0
    %354 = vmatpush2.msra.mxu0 0.0
    %355 = vmatprep.subr.mxu0 0.0
    %356 = vmatpush2.msra.mxu0 0.0
    %357 = vmatprep.subr.mxu0 0.0
    %358 = vmatpush2.msra.mxu0 0.0
    %359 = vmatprep.subr.mxu0 0.0
    %360 = vmatpush2.msra.mxu0 0.0
    %361 = vmatprep.subr.mxu0 0.0
    %362 = vmatpush2.msra.mxu0 0.0
    %363 = vmatprep.subr.mxu0 0.0
    %364 = vmatpush2.msra.mxu0 0.0
    %365 = vmatprep.subr.mxu0 0.0
    %366 = vmatpush2.msra.mxu0 0.0
    %367 = vmatprep.subr.mxu0 0.0
    %368 = vmatpush2.msra.mxu0 0.0
    %369 = vmatprep.subr.mxu0 0.0
    %370 = vmatpush2.msra.mxu0 0.0
    %371 = vmatprep.subr.mxu0 0.0
    %372 = vmatpush2.msra.mxu0 0.0
    %373 = vmatprep.subr.mxu0 0.0
    %374 = vmatpush2.msra.mxu0 0.0
    %375 = vmatprep.mubr.f32.mxu0 0.0
    %v376 = vand.u32 %v46, 4294901760
    %v377 = vsub.f32 %v46, %v376
    %v378 = vand.u32 %v377, 4294901760
    %379 = vmatmul.mubr.f32.gmra.mxu0 %v378
    %v380 = vpop.f32.mrf.mxu0
    %v381 = vadd.f32 %v303, %v380
    %v382 = vpop.f32.mrf.mxu0
    %383 = vdwg.mxu0
    %384 = vmatprep.subr.mxu0 0.0
    %385 = vmatpush1.msra.mxu0 0.0
    %386 = vmatprep.subr.mxu0 0.0
    %387 = vmatpush1.msra.mxu0 0.0
    %388 = vmatprep.subr.mxu0 0.0
    %389 = vmatpush1.msra.mxu0 0.0
    %390 = vmatprep.subr.mxu0 0.0
    %391 = vmatpush1.msra.mxu0 0.0
    %392 = vmatprep.subr.mxu0 0.0
    %393 = vmatpush1.msra.mxu0 0.0
    %394 = vmatprep.subr.mxu0 0.0
    %395 = vmatpush1.msra.mxu0 0.0
    %396 = vmatprep.subr.mxu0 0.0
    %397 = vmatpush1.msra.mxu0 0.0
    %398 = vmatprep.subr.mxu0 0.0
    %399 = vmatpush1.msra.mxu0 0.0
    %400 = vmatprep.subr.mxu0 0.0
    %401 = vmatpush1.msra.mxu0 0.0
    %402 = vmatprep.subr.mxu0 0.0
    %403 = vmatpush1.msra.mxu0 0.0
    %404 = vmatprep.subr.mxu0 0.0
    %405 = vmatpush1.msra.mxu0 0.0
    %406 = vmatprep.subr.mxu0 0.0
    %v407 = vand.u32 %v43, 4294901760
    %v408 = vsub.f32 %v43, %v407
    %v409 = vand.u32 %v408, 4294901760
    %410 = vmatpush1.msra.mxu0 %v409
    %411 = vmatprep.subr.mxu0 0.0
    %v412 = vand.u32 %v42, 4294901760
    %v413 = vsub.f32 %v42, %v412
    %v414 = vand.u32 %v413, 4294901760
    %415 = vmatpush1.msra.mxu0 %v414
    %416 = vmatprep.subr.mxu0 0.0
    %v417 = vand.u32 %v41, 4294901760
    %v418 = vsub.f32 %v41, %v417
    %v419 = vand.u32 %v418, 4294901760
    %420 = vmatpush1.msra.mxu0 %v419
    %421 = vmatprep.subr.mxu0 0.0
    %v422 = vand.u32 %v40, 4294901760
    %v423 = vsub.f32 %v40, %v422
    %v424 = vand.u32 %v423, 4294901760
    %425 = vmatpush1.msra.mxu0 %v424
    %426 = vmatprep.subr.mxu0 0.0
    %v427 = vand.u32 %v39, 4294901760
    %v428 = vsub.f32 %v39, %v427
    %v429 = vand.u32 %v428, 4294901760
    %430 = vmatpush1.msra.mxu0 %v429
    %431 = vmatprep.subr.mxu0 0.0
    %432 = vmatpush2.msra.mxu0 0.0
    %433 = vmatprep.subr.mxu0 0.0
    %434 = vmatpush2.msra.mxu0 0.0
    %435 = vmatprep.subr.mxu0 0.0
    %436 = vmatpush2.msra.mxu0 0.0
    %437 = vmatprep.subr.mxu0 0.0
    %438 = vmatpush2.msra.mxu0 0.0
    %439 = vmatprep.subr.mxu0 0.0
    %440 = vmatpush2.msra.mxu0 0.0
    %441 = vmatprep.subr.mxu0 0.0
    %442 = vmatpush2.msra.mxu0 0.0
    %443 = vmatprep.subr.mxu0 0.0
    %444 = vmatpush2.msra.mxu0 0.0
    %445 = vmatprep.subr.mxu0 0.0
    %446 = vmatpush2.msra.mxu0 0.0
    %447 = vmatprep.subr.mxu0 0.0
    %448 = vmatpush2.msra.mxu0 0.0
    %449 = vmatprep.subr.mxu0 0.0
    %450 = vmatpush2.msra.mxu0 0.0
    %451 = vmatprep.subr.mxu0 0.0
    %452 = vmatpush2.msra.mxu0 0.0
    %453 = vmatprep.subr.mxu0 0.0
    %454 = vmatpush2.msra.mxu0 0.0
    %455 = vmatprep.subr.mxu0 0.0
    %456 = vmatpush2.msra.mxu0 0.0
    %457 = vmatprep.subr.mxu0 0.0
    %458 = vmatpush2.msra.mxu0 0.0
    %459 = vmatprep.subr.mxu0 0.0
    %460 = vmatpush2.msra.mxu0 0.0
    %461 = vmatprep.subr.mxu0 0.0
    %462 = vmatpush2.msra.mxu0 0.0
    %463 = vmatprep.mubr.f32.mxu0 0.0
    %v464 = vand.u32 %v46, 4294901760
    %465 = vmatmul.mubr.f32.gmra.mxu0 %v464
    %v466 = vpop.f32.mrf.mxu0
    %v467 = vadd.f32 %v381, %v466
    %v468 = vpop.f32.mrf.mxu0
    %469 = vdwg.mxu0
    %470 = vmatprep.subr.mxu0 0.0
    %471 = vmatpush1.msra.mxu0 0.0
    %472 = vmatprep.subr.mxu0 0.0
    %473 = vmatpush1.msra.mxu0 0.0
    %474 = vmatprep.subr.mxu0 0.0
    %475 = vmatpush1.msra.mxu0 0.0
    %476 = vmatprep.subr.mxu0 0.0
    %477 = vmatpush1.msra.mxu0 0.0
    %478 = vmatprep.subr.mxu0 0.0
    %479 = vmatpush1.msra.mxu0 0.0
    %480 = vmatprep.subr.mxu0 0.0
    %481 = vmatpush1.msra.mxu0 0.0
    %482 = vmatprep.subr.mxu0 0.0
    %483 = vmatpush1.msra.mxu0 0.0
    %484 = vmatprep.subr.mxu0 0.0
    %485 = vmatpush1.msra.mxu0 0.0
    %486 = vmatprep.subr.mxu0 0.0
    %487 = vmatpush1.msra.mxu0 0.0
    %488 = vmatprep.subr.mxu0 0.0
    %489 = vmatpush1.msra.mxu0 0.0
    %490 = vmatprep.subr.mxu0 0.0
    %491 = vmatpush1.msra.mxu0 0.0
    %492 = vmatprep.subr.mxu0 0.0
    %v493 = vand.u32 %v43, 4294901760
    %494 = vmatpush1.msra.mxu0 %v493
    %495 = vmatprep.subr.mxu0 0.0
    %v496 = vand.u32 %v42, 4294901760
    %497 = vmatpush1.msra.mxu0 %v496
    %498 = vmatprep.subr.mxu0 0.0
    %v499 = vand.u32 %v41, 4294901760
    %500 = vmatpush1.msra.mxu0 %v499
    %501 = vmatprep.subr.mxu0 0.0
    %v502 = vand.u32 %v40, 4294901760
    %503 = vmatpush1.msra.mxu0 %v502
    %504 = vmatprep.subr.mxu0 0.0
    %v505 = vand.u32 %v39, 4294901760
    %506 = vmatpush1.msra.mxu0 %v505
    %507 = vmatprep.subr.mxu0 0.0
    %508 = vmatpush2.msra.mxu0 0.0
    %509 = vmatprep.subr.mxu0 0.0
    %510 = vmatpush2.msra.mxu0 0.0
    %511 = vmatprep.subr.mxu0 0.0
    %512 = vmatpush2.msra.mxu0 0.0
    %513 = vmatprep.subr.mxu0 0.0
    %514 = vmatpush2.msra.mxu0 0.0
    %515 = vmatprep.subr.mxu0 0.0
    %516 = vmatpush2.msra.mxu0 0.0
    %517 = vmatprep.subr.mxu0 0.0
    %518 = vmatpush2.msra.mxu0 0.0
    %519 = vmatprep.subr.mxu0 0.0
    %520 = vmatpush2.msra.mxu0 0.0
    %521 = vmatprep.subr.mxu0 0.0
    %522 = vmatpush2.msra.mxu0 0.0
    %523 = vmatprep.subr.mxu0 0.0
    %524 = vmatpush2.msra.mxu0 0.0
    %525 = vmatprep.subr.mxu0 0.0
    %526 = vmatpush2.msra.mxu0 0.0
    %527 = vmatprep.subr.mxu0 0.0
    %528 = vmatpush2.msra.mxu0 0.0
    %529 = vmatprep.subr.mxu0 0.0
    %530 = vmatpush2.msra.mxu0 0.0
    %531 = vmatprep.subr.mxu0 0.0
    %532 = vmatpush2.msra.mxu0 0.0
    %533 = vmatprep.subr.mxu0 0.0
    %534 = vmatpush2.msra.mxu0 0.0
    %535 = vmatprep.subr.mxu0 0.0
    %536 = vmatpush2.msra.mxu0 0.0
    %537 = vmatprep.subr.mxu0 0.0
    %538 = vmatpush2.msra.mxu0 0.0
    %539 = vmatprep.mubr.f32.mxu0 0.0
    %v540 = vand.u32 %v46, 4294901760
    %541 = vmatmul.mubr.f32.gmra.mxu0 %v540
    %v542 = vpop.f32.mrf.mxu0
    %v543 = vadd.f32 %v467, %v542
    %v544 = vpop.f32.mrf.mxu0
    %545 = vdwg.mxu0
    %v546 = vmax.f32 %v543, 0.0
    %v547 = vmul.f32 %v546, -1.0204082
    %v548 = vmul.f32 %v547, 1.442695
    %v549 = vpow.pop %v548
    %v550 = vsub.f32 1.0, %v549
    %v551 = vadd.f32 %v550, 1e-08
    %v552 = vrsqrt.pop %v551
    %v553 = vmul.f32 %v551, %v552
    %vm554 = vcmp.eq.f32.partialorder %v551, inf
    %v555 = vsel %vm554, %v551, %v553
    %vm556 = vcmp.eq.f32.partialorder %v551, 0.0
    %v557 = vand.u32 %v551, 2147483648
    %v558 = vsel %vm556, %v557, %v555
    %559 = vst [vmem:[#allocation7] sm:$0xff] %v558
    // Predicated region
    $region18: #{tpu_custom_call.1} parent=1 // pred_check
      _
    $region19: #{tpu_custom_call.1} parent=1 // pred_check_branch
      %561 = sbr.rel (0) target = $region21
    $region20: #{tpu_custom_call.1} parent=1 // pred_region
      %s563 = ssub.s32 128, 128
      %564 = vsyncadd [#allocation4], %s563
      %s566 = sshll.u32 [#allocation7], 4
      %s567 = int_to_ptr.vmem [resolvable:$true] %s566
      %569 = dma.vmem_to_hbm [thread:$0]  %s567, 128, %s2, [#allocation4]
    $region21: #{tpu_custom_call.1} parent=1 // pred_fallthru
      _
    // Predicated region
    $region22: #{tpu_custom_call.1} parent=1 // pred_check
      _
    $region23: #{tpu_custom_call.1} parent=1 // pred_check_branch
      %571 = sbr.rel (0) target = $region25
    $region24: #{tpu_custom_call.1} parent=1 // pred_region
      %572 = dma.done [#allocation4], 128
    $region25: #{tpu_custom_call.1} parent=1 // pred_fallthru
      _
    %573 = vsyncpa [#allocation3], 1
    %574 = vsyncpa [#allocation6], 1
    %575 = vsyncpa [#allocation4], 1

</llo_original>
